<compile_context>
chip_gen: v7x
topology: tpu7x:2x2x1
jax: 0.10.0
libtpu: 0.0.40
codegen_flags: <defaults>
</compile_context>

<pallas_src>
import numpy as np
import jax
import jax.numpy as jnp
from jax.experimental import pallas as pl
from jax.experimental.pallas import tpu as pltpu


def make_wso_kernel(nch, act, upper):
    """Builds the Pallas kernel body for a given (static) channel count / act."""
    upper = float(upper)
    half_upper = 0.5 * upper

    def kernel(w_ref, b_ref, x_ref, o_ref):
        # w_ref, b_ref : SMEM (nch,) f32 scalars
        # x_ref        : VMEM (1, tile_d, tile_c) input block
        # o_ref        : VMEM (1, nch, tile_d, tile_c) output block
        xv = x_ref[0]

        # Hoist the SMEM scalar reads out of the (unrolled) channel loop.
        ws = [w_ref[c] for c in range(nch)]
        bs = [b_ref[c] for c in range(nch)]

        for c in range(nch):  # nch is small & static -> fully unrolled
            if act == "sigmoid":
                # upper*sigmoid(w*x+b) == 0.5*upper*(1 + tanh(0.5*(w*x+b)))
                # -> exactly one EUP op (tanh) per output element.
                z = xv * (0.5 * ws[c]) + (0.5 * bs[c])
                y = half_upper + half_upper * jnp.tanh(z)
            elif act == "relu":
                # F.relu(z); z[z > upper] = upper  ==  clamp(z, 0, upper)
                z = xv * ws[c] + bs[c]
                y = jnp.minimum(jnp.maximum(z, 0.0), upper)
            else:
                y = xv * ws[c] + bs[c]
            o_ref[0, c] = y.astype(o_ref.dtype)

    return kernel


def _choose_tiles(D, HW, nch, vmem_budget_bytes):
    """Pick (tile_d, tile_c) so 2*(1+nch)*tile_d*tile_c*4 <= vmem_budget_bytes."""
    max_block_elems = max(8 * 128, vmem_budget_bytes // (2 * 4 * (1 + nch)))

    # Lane (last) dim: keep it as wide as possible; full dim is always legal,
    # otherwise a large multiple of 128.
    if HW <= max_block_elems:
        tile_c = HW
    else:
        tile_c = max(128, (min(HW, max_block_elems) // 128) * 128)

    # Sublane dim: fill the rest of the budget; full dim or a multiple of 8.
    max_d = max(1, max_block_elems // tile_c)
    if D <= max_d:
        tile_d = D
    else:
        tile_d = min(D, max(8, (max_d // 8) * 8))

    return tile_d, tile_c


def wso_forward(x, w, b, *, act="sigmoid", upper=255.0, out_dtype=None,
                vmem_budget_bytes=32 * 1024 * 1024):
    """x: (N, 1, D, H, W) f32 (NCDHW, like torch Conv3d).  Returns (N, nch, D, H, W)."""
    N, cin, D, H, W = x.shape
    assert cin == 1, "WSO has input_ch=1"
    nch = int(w.shape[0])
    HW = H * W
    out_dtype = x.dtype if out_dtype is None else jnp.dtype(out_dtype)

    x3 = x.reshape(N, D, HW)  # free reshape, lane-dense last dim

    tile_d, tile_c = _choose_tiles(D, HW, nch, vmem_budget_bytes)
    grid = (N, pl.cdiv(D, tile_d), pl.cdiv(HW, tile_c))

    block_bytes = 2 * 4 * tile_d * tile_c * (1 + nch)  # double-buffered working set
    vmem_limit = int(min(48 * 1024 * 1024, max(32 * 1024 * 1024,
                                               block_bytes + 8 * 1024 * 1024)))

    total_elems = N * D * HW
    cost = pl.CostEstimate(
        flops=2 * nch * total_elems,
        transcendentals=(nch * total_elems) if act == "sigmoid" else 0,
        bytes_accessed=total_elems * x.dtype.itemsize
        + nch * total_elems * jnp.dtype(out_dtype).itemsize,
    )

    out = pl.pallas_call(
        make_wso_kernel(nch, act, upper),
        out_shape=jax.ShapeDtypeStruct((N, nch, D, HW), out_dtype),
        grid_spec=pl.GridSpec(
            grid=grid,
            in_specs=[
                pl.BlockSpec(memory_space=pltpu.MemorySpace.SMEM),   # w scalars
                pl.BlockSpec(memory_space=pltpu.MemorySpace.SMEM),   # b scalars
                pl.BlockSpec((1, tile_d, tile_c),
                             lambda n, d, c: (n, d, c)),             # x block
            ],
            out_specs=pl.BlockSpec((1, nch, tile_d, tile_c),
                                   lambda n, d, c: (n, 0, d, c)),    # final layout
        ),
        compiler_params=pltpu.CompilerParams(
            dimension_semantics=("parallel", "parallel", "parallel"),
            vmem_limit_bytes=vmem_limit,
        ),
        cost_estimate=cost,
    )(w, b, x3)

    # (N, nch, D, H*W) -> (N, nch, D, H, W): contiguous reshape, no transpose.
    return out.reshape(N, nch, D, H, W)


def wso_get_params(wl, ww, *, act="sigmoid", upper=255.0, smooth=1.0):
    """Deterministic weight init, identical to WSO.get_params."""
    wl = np.asarray(wl, dtype=np.float64)
    ww = np.asarray(ww, dtype=np.float64)
    if act == "relu":
        w = upper / ww
        b = -1.0 * upper * (wl - ww / 2.0) / ww
    elif act == "sigmoid":
        logt = np.log(upper / smooth - 1.0)
        w = 2.0 / ww * logt
        b = -2.0 * wl / ww * logt
    else:
        raise ValueError(act)
    return jnp.asarray(w, dtype=jnp.float32), jnp.asarray(b, dtype=jnp.float32)


if __name__ == "__main__":
    # Module config: nch=3 CT windows, act='sigmoid', dim=3, upper=255, smooth=1
    nch = 3
    wl = [40.0, 80.0, 400.0]       # window levels
    ww = [80.0, 200.0, 2000.0]     # window widths
    upper, smooth = 255.0, 1.0

    w, b = wso_get_params(wl, ww, act="sigmoid", upper=upper, smooth=smooth)

    # Small 3D input consistent with Conv3d NCDHW, single input channel.
    N, D, H, W = 2, 8, 16, 16
    key = jax.random.PRNGKey(0)
    x = jax.random.uniform(
        key, (N, 1, D, H, W), dtype=jnp.float32, minval=-1000.0, maxval=2000.0
    )

    out = wso_forward(x, w, b, act="sigmoid", upper=upper)
    out = jax.block_until_ready(out)

    # Pure-JAX reference of the same forward pass (sigmoid branch).
    ref = (
        jax.nn.sigmoid(x * w[None, :, None, None, None] + b[None, :, None, None, None])
        * upper
    )
    assert out.shape == (N, nch, D, H, W)
    assert jnp.allclose(out, ref, atol=1e-3, rtol=1e-3)

    # Also sanity-check the relu/clamp branch.
    wr, br = wso_get_params(wl, ww, act="relu", upper=upper)
    out_r = jax.block_until_ready(wso_forward(x, wr, br, act="relu", upper=upper))
    zr = x * wr[None, :, None, None, None] + br[None, :, None, None, None]
    ref_r = jnp.clip(zr, 0.0, upper)
    assert jnp.allclose(out_r, ref_r, atol=1e-3, rtol=1e-3)

    print("KERNEL_OK")
</pallas_src>

<mosaic_0001>
module attributes {stable_mosaic.version = 11 : i64} {
  func.func @kernel(%arg0: i32, %arg1: i32, %arg2: i32, %arg3: memref<3xf32, #tpu.memory_space<smem>>, %arg4: memref<3xf32, #tpu.memory_space<smem>>, %arg5: memref<1x8x256xf32, #tpu.memory_space<vmem>>, %arg6: memref<1x3x8x256xf32, #tpu.memory_space<vmem>>) attributes {dimension_semantics = [#tpu.dimension_semantics<parallel>, #tpu.dimension_semantics<parallel>, #tpu.dimension_semantics<parallel>], iteration_bounds = array<i64: 2, 1, 1>, scalar_prefetch = 0 : i64, scratch_operands = 0 : i64, tpu.core_type = #tpu.core_type<tc>, window_params = [{transform_indices = @transform_0, window_bounds = array<i64: 3>}, {transform_indices = @transform_1, window_bounds = array<i64: 3>}, {transform_indices = @transform_2, window_bounds = array<i64: 1, 8, 256>}, {transform_indices = @transform_3, window_bounds = array<i64: 1, 3, 8, 256>}]} {
    %c0 = arith.constant 0 : index
    %c0_0 = arith.constant 0 : index
    %c0_1 = arith.constant 0 : index
    %0 = vector.load %arg5[%c0, %c0_0, %c0_1] : memref<1x8x256xf32, #tpu.memory_space<vmem>>, vector<1x8x256xf32>
    %1 = vector.shape_cast %0 : vector<1x8x256xf32> to vector<8x256xf32>
    %c0_2 = arith.constant 0 : index
    %2 = memref.load %arg3[%c0_2] : memref<3xf32, #tpu.memory_space<smem>>
    %c1 = arith.constant 1 : index
    %3 = memref.load %arg3[%c1] : memref<3xf32, #tpu.memory_space<smem>>
    %c2 = arith.constant 2 : index
    %4 = memref.load %arg3[%c2] : memref<3xf32, #tpu.memory_space<smem>>
    %c0_3 = arith.constant 0 : index
    %5 = memref.load %arg4[%c0_3] : memref<3xf32, #tpu.memory_space<smem>>
    %c1_4 = arith.constant 1 : index
    %6 = memref.load %arg4[%c1_4] : memref<3xf32, #tpu.memory_space<smem>>
    %c2_5 = arith.constant 2 : index
    %7 = memref.load %arg4[%c2_5] : memref<3xf32, #tpu.memory_space<smem>>
    %cst = arith.constant 5.000000e-01 : f32
    %8 = arith.mulf %cst, %2 : f32
    %9 = vector.broadcast %8 : f32 to vector<8x256xf32>
    %10 = arith.mulf %1, %9 : vector<8x256xf32>
    %cst_6 = arith.constant 5.000000e-01 : f32
    %11 = arith.mulf %cst_6, %5 : f32
    %12 = vector.broadcast %11 : f32 to vector<8x256xf32>
    %13 = arith.addf %10, %12 : vector<8x256xf32>
    %14 = math.tanh %13 : vector<8x256xf32>
    %cst_7 = arith.constant 1.275000e+02 : f32
    %15 = vector.broadcast %cst_7 : f32 to vector<8x256xf32>
    %16 = arith.mulf %15, %14 : vector<8x256xf32>
    %cst_8 = arith.constant 1.275000e+02 : f32
    %17 = vector.broadcast %cst_8 : f32 to vector<8x256xf32>
    %18 = arith.addf %17, %16 : vector<8x256xf32>
    %c0_9 = arith.constant 0 : index
    %c0_10 = arith.constant 0 : index
    %c0_11 = arith.constant 0 : index
    %c0_12 = arith.constant 0 : index
    %19 = vector.load %arg6[%c0_9, %c0_10, %c0_11, %c0_12] : memref<1x3x8x256xf32, #tpu.memory_space<vmem>>, vector<1x1x8x256xf32>
    %20 = vector.shape_cast %19 : vector<1x1x8x256xf32> to vector<8x256xf32>
    %21 = vector.shape_cast %18 : vector<8x256xf32> to vector<1x1x8x256xf32>
    tpu.vector_store %arg6[%c0_9, %c0_10, %c0_11, %c0_12], %21 {strides = array<i32>} : memref<1x3x8x256xf32, #tpu.memory_space<vmem>>, vector<1x1x8x256xf32>,
    %cst_13 = arith.constant 5.000000e-01 : f32
    %22 = arith.mulf %cst_13, %3 : f32
    %23 = vector.broadcast %22 : f32 to vector<8x256xf32>
    %24 = arith.mulf %1, %23 : vector<8x256xf32>
    %cst_14 = arith.constant 5.000000e-01 : f32
    %25 = arith.mulf %cst_14, %6 : f32
    %26 = vector.broadcast %25 : f32 to vector<8x256xf32>
    %27 = arith.addf %24, %26 : vector<8x256xf32>
    %28 = math.tanh %27 : vector<8x256xf32>
    %cst_15 = arith.constant 1.275000e+02 : f32
    %29 = vector.broadcast %cst_15 : f32 to vector<8x256xf32>
    %30 = arith.mulf %29, %28 : vector<8x256xf32>
    %cst_16 = arith.constant 1.275000e+02 : f32
    %31 = vector.broadcast %cst_16 : f32 to vector<8x256xf32>
    %32 = arith.addf %31, %30 : vector<8x256xf32>
    %c0_17 = arith.constant 0 : index
    %c1_18 = arith.constant 1 : index
    %c0_19 = arith.constant 0 : index
    %c0_20 = arith.constant 0 : index
    %33 = vector.load %arg6[%c0_17, %c1_18, %c0_19, %c0_20] : memref<1x3x8x256xf32, #tpu.memory_space<vmem>>, vector<1x1x8x256xf32>
    %34 = vector.shape_cast %33 : vector<1x1x8x256xf32> to vector<8x256xf32>
    %35 = vector.shape_cast %32 : vector<8x256xf32> to vector<1x1x8x256xf32>
    tpu.vector_store %arg6[%c0_17, %c1_18, %c0_19, %c0_20], %35 {strides = array<i32>} : memref<1x3x8x256xf32, #tpu.memory_space<vmem>>, vector<1x1x8x256xf32>,
    %cst_21 = arith.constant 5.000000e-01 : f32
    %36 = arith.mulf %cst_21, %4 : f32
    %37 = vector.broadcast %36 : f32 to vector<8x256xf32>
    %38 = arith.mulf %1, %37 : vector<8x256xf32>
    %cst_22 = arith.constant 5.000000e-01 : f32
    %39 = arith.mulf %cst_22, %7 : f32
    %40 = vector.broadcast %39 : f32 to vector<8x256xf32>
    %41 = arith.addf %38, %40 : vector<8x256xf32>
    %42 = math.tanh %41 : vector<8x256xf32>
    %cst_23 = arith.constant 1.275000e+02 : f32
    %43 = vector.broadcast %cst_23 : f32 to vector<8x256xf32>
    %44 = arith.mulf %43, %42 : vector<8x256xf32>
    %cst_24 = arith.constant 1.275000e+02 : f32
    %45 = vector.broadcast %cst_24 : f32 to vector<8x256xf32>
    %46 = arith.addf %45, %44 : vector<8x256xf32>
    %c0_25 = arith.constant 0 : index
    %c2_26 = arith.constant 2 : index
    %c0_27 = arith.constant 0 : index
    %c0_28 = arith.constant 0 : index
    %47 = vector.load %arg6[%c0_25, %c2_26, %c0_27, %c0_28] : memref<1x3x8x256xf32, #tpu.memory_space<vmem>>, vector<1x1x8x256xf32>
    %48 = vector.shape_cast %47 : vector<1x1x8x256xf32> to vector<8x256xf32>
    %49 = vector.shape_cast %46 : vector<8x256xf32> to vector<1x1x8x256xf32>
    tpu.vector_store %arg6[%c0_25, %c2_26, %c0_27, %c0_28], %49 {strides = array<i32>} : memref<1x3x8x256xf32, #tpu.memory_space<vmem>>, vector<1x1x8x256xf32>,
    return
  }
  func.func @transform_0(%arg0: i32, %arg1: i32, %arg2: i32) -> i32 {
    %c0_i32 = arith.constant 0 : i32
    %c0_i32_0 = arith.constant 0 : i32
    return %c0_i32 : i32
  }
  func.func @transform_1(%arg0: i32, %arg1: i32, %arg2: i32) -> i32 {
    %c0_i32 = arith.constant 0 : i32
    %c0_i32_0 = arith.constant 0 : i32
    return %c0_i32 : i32
  }
  func.func @transform_2(%arg0: i32, %arg1: i32, %arg2: i32) -> (i32, i32, i32) {
    %c0_i32 = arith.constant 0 : i32
    return %arg0, %arg1, %arg2 : i32, i32, i32
  }
  func.func @transform_3(%arg0: i32, %arg1: i32, %arg2: i32) -> (i32, i32, i32, i32) {
    %c0_i32 = arith.constant 0 : i32
    %c0_i32_0 = arith.constant 0 : i32
    return %arg0, %c0_i32, %arg1, %arg2 : i32, i32, i32, i32
  }
}

</mosaic_0001>

<llo_original>
// kernel: tpu_custom_call.1
$region0: #{tpu_custom_call.1}
  #allocation0 [shape = 'u32[]', space=smem, size = 0x4, offset = 0x4, fixed_abs, tag = 'smem constant byte address 0x4 - core index']
  #allocation1 [shape = 'u32[144,128]{1,0:T(1,128)}', space=vmem, size = 0x12000, scoped, tag = 'internal scratch']
  %s0 = inlined_call_operand.hbm [shape: f32[3], index: 0, kind: input, shape index: {}]
  %s1 = inlined_call_operand.vmem [shape: f32[3], index: 1, kind: input, shape index: {}]
  %s2 = inlined_call_operand.hbm [shape: f32[2,8,256], index: 2, kind: input, shape index: {}]
  %s3 = inlined_call_operand.hbm [shape: f32[2,3,8,256], index: 3, kind: output, shape index: {}]
  %s4 = sld [smem:[#allocation0]]
  $region57: #{tpu_custom_call.1} parent=0
    _
  %s6 = ssub.s32 1, %s4
  %s7 = scalar_select 0, %s6, %s4
  $region1: #{tpu_custom_call.1} parent=0
    #allocation2 [shape = 'u8[512]{0}', space=smem, size = 0x200, scoped, tag = 'input window, operand 0, single buffered']
    #allocation3 [shape = 's32[2]{0}', space=sflag, size = 0x8, scoped, tag = 'scoped memory for tpu_custom_call.1']
    #allocation4 [shape = 's32[2]{0}', space=sflag, size = 0x8, scoped, tag = 'scoped memory for tpu_custom_call.1']
    #allocation5 [shape = 's32[2]{0}', space=sflag, size = 0x8, scoped, tag = 'scoped memory for tpu_custom_call.1']
    #allocation6 [shape = 's32[2]{0}', space=sflag, size = 0x8, scoped, tag = 'scoped memory for tpu_custom_call.1']
    #allocation7 [shape = 'u8[512]{0}', space=smem, size = 0x200, scoped, tag = 'input window, operand 1, single buffered']
    #allocation8 [shape = 'u8[16384]{0}', space=vmem, size = 0x4000, scoped, tag = 'input window, operand 2']
    #allocation9 [shape = 'u8[49152]{0}', space=vmem, size = 0xc000, scoped, tag = 'output window, operand 0']
    %8 = vsyncpa [#allocation5], 0
    %9 = vsyncpa [#allocation6], 0
    %10 = vsyncpa [#allocation3], 0
    %s11 = scalar_lea.sflag [#allocation3], 1
    %12 = vsyncpa %s11, 0
    %13 = vsyncpa [#allocation4], 0
    %s14 = scalar_lea.sflag [#allocation4], 1
    %15 = vsyncpa %s14, 0
    loop: start=0, step=1, limit=4
    $region2: #{tpu_custom_call.1} parent=1 // loop_pre_header
      _
    $region3: #{tpu_custom_call.1} parent=1 // loop_header
      %s17 = sphi 0, %s21
      %p18 = scmp.ge.s32.totalorder %s17, 4
      %s24 = sphi 0, %s43
      %s25 = sphi 0, %s39
      %s26 = sphi 0, %s35
      %s27 = sphi 0, %s24
      %s28 = sphi 0, %s25
      %s29 = sphi 0, %s26
      %s30 = sphi 0, %s27
      %s31 = sphi 0, %s28
      %s32 = sphi 0, %s29
      %s44 = sphi 0, %s44
      %s46 = sphi 0, %s44
      %s47 = sphi 0, %s46
      %s61 = sphi 0, %s47
      %s65 = sphi 0, %s65
      %s67 = sphi 0, %s65
      %s68 = sphi 0, %s67
      %s82 = sphi 0, %s68
      %s92 = sphi 0, %s94
      %s95 = sphi 0, %s92
      %s96 = sphi 0, %s95
      %s112 = sphi 0, %s96
      %s122 = sphi 0, %s124
      %s125 = sphi 0, %s122
      %s126 = sphi 0, %s125
      %s142 = sphi 0, %s126
    $region4: #{tpu_custom_call.1} parent=1 // loop_header_branch
      %20 = sbr.rel (%p18) target = $region8
    $region5: #{tpu_custom_call.1} parent=1 // loop_body
      %s22 = ssub.s32 %s17, 1
      %s23 = ssub.s32 %s17, 2
      %s33 = sadd.s32 1, %s26
      %p34 = scmp.ge.s32.totalorder %s33, 1
      %s35 = scalar_select %p34, 0, %s33
      %s36 = sadd.s32 1, %s25
      %s37 = scalar_select %p34, %s36, %s25
      %p38 = scmp.ge.s32.totalorder %s37, 1
      %s39 = scalar_select %p38, 0, %s37
      %s40 = sadd.s32 1, %s24
      %s41 = scalar_select %p38, %s40, %s24
      %p42 = scmp.ge.s32.totalorder %s41, 2
      %s43 = scalar_select %p42, 0, %s41
      %s45 = sadd.s32 %s44, 1
      %p48 = scmp.eq.s32.totalorder %s17, 1
      %p49 = scmp.ne.s32.totalorder %s44, %s46
      %p50 = scmp.eq.s32.totalorder %s17, 0
      %p51 = por %p49, %p50
      %p52 = scmp.ne.s32.totalorder %s44, %s46
      %p53 = scmp.eq.s32.totalorder %s22, 1
      %p54 = por %p52, %p53
      %p55 = scmp.ne.s32.totalorder %s46, %s47
      %p56 = scmp.eq.s32.totalorder %s22, 0
      %p57 = por %p55, %p56
      %p58 = scmp.ne.s32.totalorder %s46, %s47
      %p59 = scmp.eq.s32.totalorder %s23, 1
      %p60 = por %p58, %p59
      %p62 = scmp.ne.s32.totalorder %s47, %s61
      %p63 = scmp.eq.s32.totalorder %s23, 0
      %p64 = por %p62, %p63
      %s66 = sadd.s32 %s65, 1
      %p69 = scmp.eq.s32.totalorder %s17, 1
      %p70 = scmp.ne.s32.totalorder %s65, %s67
      %p71 = scmp.eq.s32.totalorder %s17, 0
      %p72 = por %p70, %p71
      %p73 = scmp.ne.s32.totalorder %s65, %s67
      %p74 = scmp.eq.s32.totalorder %s22, 1
      %p75 = por %p73, %p74
      %p76 = scmp.ne.s32.totalorder %s67, %s68
      %p77 = scmp.eq.s32.totalorder %s22, 0
      %p78 = por %p76, %p77
      %p79 = scmp.ne.s32.totalorder %s67, %s68
      %p80 = scmp.eq.s32.totalorder %s23, 1
      %p81 = por %p79, %p80
      %p83 = scmp.ne.s32.totalorder %s68, %s82
      %p84 = scmp.eq.s32.totalorder %s23, 0
      %p85 = por %p83, %p84
      %s86 = ssub.s32 %s24, %s43
      %s87 = ssub.s32 %s25, %s39
      %s88 = sor.u32 %s86, %s87
      %s89 = ssub.s32 %s26, %s35
      %s90 = sor.u32 %s88, %s89
      %p91 = scmp.eq.s32.totalorder %s90, 0
      %s93 = sadd.s32 %s92, 1
      %s94 = scalar_select %p91, %s92, %s93
      %p97 = pneg %p91
      %p98 = scmp.eq.s32.totalorder %s17, 1
      %p99 = por %p97, %p98
      %p100 = scmp.ne.s32.totalorder %s92, %s95
      %p101 = scmp.eq.s32.totalorder %s17, 0
      %p102 = por %p100, %p101
      %p103 = scmp.ne.s32.totalorder %s92, %s95
      %p104 = scmp.eq.s32.totalorder %s22, 1
      %p105 = por %p103, %p104
      %p106 = scmp.ne.s32.totalorder %s95, %s96
      %p107 = scmp.eq.s32.totalorder %s22, 0
      %p108 = por %p106, %p107
      %p109 = scmp.ne.s32.totalorder %s95, %s96
      %p110 = scmp.eq.s32.totalorder %s23, 1
      %p111 = por %p109, %p110
      %p113 = scmp.ne.s32.totalorder %s96, %s112
      %p114 = scmp.eq.s32.totalorder %s23, 0
      %p115 = por %p113, %p114
      %s116 = ssub.s32 %s24, %s43
      %s117 = ssub.s32 %s25, %s39
      %s118 = sor.u32 %s116, %s117
      %s119 = ssub.s32 %s26, %s35
      %s120 = sor.u32 %s118, %s119
      %p121 = scmp.eq.s32.totalorder %s120, 0
      %s123 = sadd.s32 %s122, 1
      %s124 = scalar_select %p121, %s122, %s123
      %p127 = pneg %p121
      %p128 = scmp.eq.s32.totalorder %s17, 1
      %p129 = por %p127, %p128
      %p130 = scmp.ne.s32.totalorder %s122, %s125
      %p131 = scmp.eq.s32.totalorder %s17, 0
      %p132 = por %p130, %p131
      %p133 = scmp.ne.s32.totalorder %s122, %s125
      %p134 = scmp.eq.s32.totalorder %s22, 1
      %p135 = por %p133, %p134
      %p136 = scmp.ne.s32.totalorder %s125, %s126
      %p137 = scmp.eq.s32.totalorder %s22, 0
      %p138 = por %p136, %p137
      %p139 = scmp.ne.s32.totalorder %s125, %s126
      %p140 = scmp.eq.s32.totalorder %s23, 1
      %p141 = por %p139, %p140
      %p143 = scmp.ne.s32.totalorder %s126, %s142
      %p144 = scmp.eq.s32.totalorder %s23, 0
      %p145 = por %p143, %p144
      %p146 = scmp.le.s32.totalorder 1, %s17
      %p147 = scmp.lt.s32.totalorder %s17, 3
      %p148 = pnand %p146, %p147
      %p149 = pneg %p148
      // Predicated region
      $region9: #{tpu_custom_call.1} parent=5 // pred_check
        _
      $region10: #{tpu_custom_call.1} parent=5 // pred_check_branch
        %151 = sbr.rel (%p148) target = $region12
      $region11: #{tpu_custom_call.1} parent=5 // pred_region
        %s152 = ssub.s32 %s17, 1
        // Predicated region
        $region13: #{tpu_custom_call.1} parent=11 // pred_check
          %p153 = pneg %p57
        $region14: #{tpu_custom_call.1} parent=11 // pred_check_branch
          %155 = sbr.rel (%p153) target = $region16
        $region15: #{tpu_custom_call.1} parent=11 // pred_region
          %s157 = ssub.s32 16, 16
          %158 = vsyncadd [#allocation5], %s157
          %161 = dma.hbm_to_smem %s0, 16, [#allocation2], [#allocation5]
        $region16: #{tpu_custom_call.1} parent=11 // pred_fallthru
          _
        // Predicated region
        $region17: #{tpu_custom_call.1} parent=11 // pred_check
          %p162 = pneg %p78
        $region18: #{tpu_custom_call.1} parent=11 // pred_check_branch
          %164 = sbr.rel (%p162) target = $region20
        $region19: #{tpu_custom_call.1} parent=11 // pred_region
          %s166 = ssub.s32 16, 16
          %167 = vsyncadd [#allocation6], %s166
          %s169 = sshll.u32 %s1, 4
          %s170 = int_to_ptr.vmem [resolvable:$true] %s169
          %172 = dma.vmem_to_smem %s170, 16, [#allocation7], [#allocation6]
        $region20: #{tpu_custom_call.1} parent=11 // pred_fallthru
          _
      $region12: #{tpu_custom_call.1} parent=5 // pred_fallthru
        _
      %p173 = scmp.lt.s32.totalorder %s17, 2
      // Predicated region
      $region21: #{tpu_custom_call.1} parent=5 // pred_check
        %p174 = pneg %p173
      $region22: #{tpu_custom_call.1} parent=5 // pred_check_branch
        %176 = sbr.rel (%p174) target = $region24
      $region23: #{tpu_custom_call.1} parent=5 // pred_region
        // Predicated region
        $region25: #{tpu_custom_call.1} parent=23 // pred_check
          %p177 = pneg %p102
        $region26: #{tpu_custom_call.1} parent=23 // pred_check_branch
          %179 = sbr.rel (%p177) target = $region28
        $region27: #{tpu_custom_call.1} parent=23 // pred_region
          %s180 = sand.u32 %s92, 1
          %s181 = scalar_lea.sflag [#allocation3], %s180
          %s182 = sand.u32 %s92, 1
          %s183 = smul.addr %s182, 16
          %s184 = scalar_lea.vmem [#allocation8], %s183
          %s185 = smul.u32 2, %s26
          %s187 = ssub.s32 256, 256
          %188 = vsyncadd %s181, %s187
          %s189 = smul.addr %s25, 2
          %s190 = sadd.s32 %s185, %s189
          %s191 = smul.addr %s24, 2
          %s192 = sadd.s32 %s190, %s191
          %s193 = smul.addr %s192, 128
          %s194 = scalar_lea.hbm %s2, %s193
          %s196 = sshll.u32 %s184, 4
          %s197 = int_to_ptr.vmem [resolvable:$true] %s196
          %199 = dma.hbm_to_vmem [thread:$0]  %s194, 256, %s197, %s181
        $region28: #{tpu_custom_call.1} parent=23 // pred_fallthru
          _
      $region24: #{tpu_custom_call.1} parent=5 // pred_fallthru
        _
      %p200 = scmp.le.s32.totalorder 1, %s17
      %p201 = scmp.lt.s32.totalorder %s17, 3
      %p202 = pnand %p200, %p201
      %p203 = pneg %p202
      // Predicated region
      $region29: #{tpu_custom_call.1} parent=5 // pred_check
        _
      $region30: #{tpu_custom_call.1} parent=5 // pred_check_branch
        %205 = sbr.rel (%p202) target = $region32
      $region31: #{tpu_custom_call.1} parent=5 // pred_region
        %s206 = ssub.s32 %s17, 1
        // Predicated region
        $region33: #{tpu_custom_call.1} parent=31 // pred_check
          %p207 = pneg %p57
        $region34: #{tpu_custom_call.1} parent=31 // pred_check_branch
          %209 = sbr.rel (%p207) target = $region36
        $region35: #{tpu_custom_call.1} parent=31 // pred_region
          %210 = dma.done [#allocation5], 16
        $region36: #{tpu_custom_call.1} parent=31 // pred_fallthru
          _
        // Predicated region
        $region37: #{tpu_custom_call.1} parent=31 // pred_check
          %p211 = pneg %p78
        $region38: #{tpu_custom_call.1} parent=31 // pred_check_branch
          %213 = sbr.rel (%p211) target = $region40
        $region39: #{tpu_custom_call.1} parent=31 // pred_region
          %214 = dma.done [#allocation6], 16
        $region40: #{tpu_custom_call.1} parent=31 // pred_fallthru
          _
        %s215 = sand.u32 %s95, 1
        %s216 = scalar_lea.sflag [#allocation3], %s215
        %s217 = sand.u32 %s95, 1
        %s218 = smul.addr %s217, 16
        %s219 = scalar_lea.vmem [#allocation8], %s218
        // Predicated region
        $region41: #{tpu_custom_call.1} parent=31 // pred_check
          %p220 = pneg %p108
        $region42: #{tpu_custom_call.1} parent=31 // pred_check_branch
          %222 = sbr.rel (%p220) target = $region44
        $region43: #{tpu_custom_call.1} parent=31 // pred_region
          %223 = dma.done %s216, 256
        $region44: #{tpu_custom_call.1} parent=31 // pred_fallthru
          _
        %224 = sfence
        %p225 = pneg %p57
        %p226 = pneg %p54
        %p227 = pneg %p78
        %p228 = pneg %p75
        %s229 = sand.u32 %s95, 1
        %s230 = scalar_lea.sflag [#allocation3], %s229
        %s231 = sand.u32 %s95, 1
        %s232 = smul.addr %s231, 16
        %s233 = scalar_lea.vmem [#allocation8], %s232
        %p234 = pneg %p108
        %p235 = pneg %p105
        %p236 = pneg %p138
        %p237 = pneg %p135
        %s238 = sand.u32 %s125, 1
        %s239 = scalar_lea.sflag [#allocation4], %s238
        %s240 = sand.u32 %s125, 1
        %s241 = smul.addr %s240, 48
        %s242 = scalar_lea.vmem [#allocation9], %s241
        %s243 = smul.u32 2, %s29
        %s244 = smul.u32 2, %s29
        %v245 = vld [vmem:[%s219] sm:$0xff]
        %v246 = vld [vmem:[%s219 + $0x8] sm:$0xff]
        %s247 = sld [smem:[#allocation2]]
        %s248 = sld [smem:[#allocation2 + $0x1]]
        %s249 = sld [smem:[#allocation2 + $0x2]]
        %s250 = sld [smem:[#allocation7]]
        %s251 = sld [smem:[#allocation7 + $0x1]]
        %s252 = sld [smem:[#allocation7 + $0x2]]
        %s253 = smul.f32 %s247, 0.5
        %v254 = vstv %s253
        %v255 = vmul.f32 %v245, %v254
        %v256 = vmul.f32 %v246, %v254
        %s257 = smul.f32 %s250, 0.5
        %v258 = vstv %s257
        %v259 = vadd.f32 %v255, %v258
        %v260 = vadd.f32 %v256, %v258
        %v261 = vtanh.pop %v259
        %v262 = vtanh.pop %v260
        %v263 = vmul.f32 %v261, 127.5
        %v264 = vmul.f32 %v262, 127.5
        %v265 = vadd.f32 %v263, 127.5
        %v266 = vadd.f32 %v264, 127.5
        %267 = vst [vmem:[%s242] sm:$0xff] %v265
        %268 = vst [vmem:[%s242 + $0x8] sm:$0xff] %v266
        %s269 = smul.f32 %s248, 0.5
        %v270 = vstv %s269
        %v271 = vmul.f32 %v245, %v270
        %v272 = vmul.f32 %v246, %v270
        %s273 = smul.f32 %s251, 0.5
        %v274 = vstv %s273
        %v275 = vadd.f32 %v271, %v274
        %v276 = vadd.f32 %v272, %v274
        %v277 = vtanh.pop %v275
        %v278 = vtanh.pop %v276
        %v279 = vmul.f32 %v277, 127.5
        %v280 = vmul.f32 %v278, 127.5
        %v281 = vadd.f32 %v279, 127.5
        %v282 = vadd.f32 %v280, 127.5
        %s283 = scalar_lea.vmem %s242, 16 [#allocation9]
        %284 = vst [vmem:[%s283] sm:$0xff] %v281
        %285 = vst [vmem:[%s283 + $0x8] sm:$0xff] %v282
        %s286 = smul.f32 %s249, 0.5
        %v287 = vstv %s286
        %v288 = vmul.f32 %v245, %v287
        %v289 = vmul.f32 %v246, %v287
        %s290 = smul.f32 %s252, 0.5
        %v291 = vstv %s290
        %v292 = vadd.f32 %v288, %v291
        %v293 = vadd.f32 %v289, %v291
        %v294 = vtanh.pop %v292
        %v295 = vtanh.pop %v293
        %v296 = vmul.f32 %v294, 127.5
        %v297 = vmul.f32 %v295, 127.5
        %v298 = vadd.f32 %v296, 127.5
        %v299 = vadd.f32 %v297, 127.5
        %s300 = scalar_lea.vmem %s242, 32 [#allocation9]
        %301 = vst [vmem:[%s300] sm:$0xff] %v298
        %302 = vst [vmem:[%s300 + $0x8] sm:$0xff] %v299
        %s303 = sand.u32 %s125, 1
        %s304 = scalar_lea.sflag [#allocation4], %s303
        %s305 = sand.u32 %s125, 1
        %s306 = smul.addr %s305, 48
        %s307 = scalar_lea.vmem [#allocation9], %s306
        // Predicated region
        $region45: #{tpu_custom_call.1} parent=31 // pred_check
          %p308 = pneg %p135
        $region46: #{tpu_custom_call.1} parent=31 // pred_check_branch
          %310 = sbr.rel (%p308) target = $region48
        $region47: #{tpu_custom_call.1} parent=31 // pred_region
          %s311 = smul.u32 2, %s29
          %s313 = ssub.s32 768, 768
          %314 = vsyncadd %s304, %s313
          %s315 = smul.addr %s28, 2
          %s316 = sadd.s32 %s311, %s315
          %s317 = smul.addr %s27, 6
          %s318 = sadd.s32 %s316, %s317
          %s319 = smul.addr %s318, 128
          %s320 = scalar_lea.hbm %s3, %s319
          %s321 = sshll.u32 %s307, 4
          %s322 = int_to_ptr.vmem [resolvable:$true] %s321
          %327 = dma.vmem_to_hbm [thread:$0]  %s322, 768, %s320, %s304, 256, 256, 16
        $region48: #{tpu_custom_call.1} parent=31 // pred_fallthru
          _
      $region32: #{tpu_custom_call.1} parent=5 // pred_fallthru
        _
      %p328 = scmp.le.s32.totalorder 2, %s17
      // Predicated region
      $region49: #{tpu_custom_call.1} parent=5 // pred_check
        %p329 = pneg %p328
      $region50: #{tpu_custom_call.1} parent=5 // pred_check_branch
        %331 = sbr.rel (%p329) target = $region52
      $region51: #{tpu_custom_call.1} parent=5 // pred_region
        %s332 = ssub.s32 %s17, 2
        // Predicated region
        $region53: #{tpu_custom_call.1} parent=51 // pred_check
          %p333 = pneg %p141
        $region54: #{tpu_custom_call.1} parent=51 // pred_check_branch
          %335 = sbr.rel (%p333) target = $region56
        $region55: #{tpu_custom_call.1} parent=51 // pred_region
          %s336 = sand.u32 %s126, 1
          %s337 = scalar_lea.sflag [#allocation4], %s336
          %s338 = sand.u32 %s126, 1
          %s339 = smul.addr %s338, 48
          %s340 = scalar_lea.vmem [#allocation9], %s339
          %341 = dma.done %s337, 768
        $region56: #{tpu_custom_call.1} parent=51 // pred_fallthru
          _
      $region52: #{tpu_custom_call.1} parent=5 // pred_fallthru
        _
    $region6: #{tpu_custom_call.1} parent=1 // loop_footer
      %s21 = sadd.s32 1, %s17
    $region7: #{tpu_custom_call.1} parent=1 // loop_footer_branch
      %16 = sbr.rel target = $region3
    $region8: #{tpu_custom_call.1} parent=1 // loop_exit
      _
    %342 = vsyncpa [#allocation3], 1
    %s343 = scalar_lea.sflag [#allocation3], 1
    %344 = vsyncpa %s343, 1
    %345 = vsyncpa [#allocation4], 1
    %s346 = scalar_lea.sflag [#allocation4], 1
    %347 = vsyncpa %s346, 1
    %348 = vsyncpa [#allocation5], 1
    %s349 = scalar_lea.sflag [#allocation5], 1
    %350 = vsyncpa %s349, 1
    %351 = vsyncpa [#allocation6], 1
    %s352 = scalar_lea.sflag [#allocation6], 1
    %353 = vsyncpa %s352, 1

</llo_original>
